<compile_context>
chip_gen: v7x
topology: tpu7x:2x2x1
jax: 0.10.0
libtpu: 0.0.40
codegen_flags: <defaults>
</compile_context>

<pallas_src>
import jax
import jax.numpy as jnp
from jax.experimental import pallas as pl
from jax.experimental.pallas import tpu as pltpu


def _triples_kernel(pos_ref, posi_ref, idx_ref, out_ref):
    # pos_ref:  (bB, D, A)  f32   positions^T per batch in this block
    # posi_ref: (bB, D, tN) f32   central-atom position per flattened slot
    # idx_ref:  (bB, 2, tN) i32   row 0 = neighbors_j, row 1 = neighbors_k
    # out_ref:  (bB, 3, tN) f32   rows = r_ij, r_ik, r_jk
    bB, D, A = pos_ref.shape
    tN = idx_ref.shape[2]

    one = jnp.float32(1.0)
    zero = jnp.float32(0.0)
    eps = jnp.float32(1e-9)

    # Atom ids along the sublane axis; reused for both neighbor masks and for
    # every batch in this block.
    # TODO(synk): hoist the iota into a persistent VMEM scratch (or switch to a
    # real lane gather for large A) once the per-step VPU cost matters.
    src = jax.lax.broadcasted_iota(jnp.int32, (A, tN), 0)

    for b in range(bB):  # static unroll over the batch block
        pos_t = pos_ref[b]           # (D, A)
        pos_i = posi_ref[b]          # (D, tN)
        idx = idx_ref[b]             # (2, tN)

        # 0/1 selection masks (one per neighbor stream) — no concat copy.
        sel_j = jnp.where(src == idx[0:1, :], one, zero)   # (A, tN)
        sel_k = jnp.where(src == idx[1:2, :], one, zero)   # (A, tN)

        # One-hot MXU gather: (D, A) @ (A, tN) -> (D, tN).
        pos_j = jnp.dot(pos_t, sel_j, preferred_element_type=jnp.float32)
        pos_k = jnp.dot(pos_t, sel_k, preferred_element_type=jnp.float32)

        def dist(a, c):
            d = a - c                                                     # (D, tN)
            return jnp.sqrt(jnp.sum(d * d, axis=0, keepdims=True)) + eps  # (1, tN)

        out_ref[b] = jnp.concatenate(
            [dist(pos_j, pos_i), dist(pos_k, pos_i), dist(pos_j, pos_k)], axis=0)


def _choose_tile_n(N, A, cap_elems=512 * 1024):
    """Largest multiple-of-128 lane tile with A*tile <= cap_elems.

    cap_elems = 512K keeps each (A, tile) f32 selection mask at <= 2 MiB, so the
    per-step working set stays far below the 48 MiB VMEM limit we request
    (safe on v7x's 64 MiB per-TensorCore VMEM as well as v5e/v6e).
    """
    n_pad = -(-N // 128) * 128
    max_tile = max(128, ((cap_elems // max(A, 1)) // 128) * 128)
    return min(n_pad, max_tile)


def _choose_batch_block(B, A, n_pad, tile_n, *, target_lanes=1024,
                        mask_budget_bytes=8 * 1024 * 1024, max_bb=8):
    """Pick how many batches to process per grid step (must divide B).

    Amortizes the ~0.35 us per-step overhead for small A*T while keeping the
    per-step mask working set bounded and, when possible, >= 2 grid steps so
    both TensorCores on v7x get work.
    """
    steps_n = n_pad // tile_n
    bb = 1
    for cand in range(1, B + 1):
        if cand > max_bb:
            break
        if B % cand:
            continue
        if cand > 1 and (B // cand) * steps_n < 2:
            continue  # would leave a single grid step -> one idle TC on v7x
        if cand * 2 * A * tile_n * 4 > mask_budget_bytes:
            break
        bb = cand
        if cand * tile_n >= target_lanes:
            break
    return bb


def triples_distances(positions, neighbors_j, neighbors_k, *, tile_n=None,
                      batch_block=None):
    """Pallas implementation of TriplesDistances.forward (no PBC / cell)."""
    positions = positions.astype(jnp.float32)
    B, A, D = positions.shape
    T = neighbors_j.shape[-1]
    N = A * T

    if tile_n is None:
        tile_n = _choose_tile_n(N, A)
    # Pad the flattened triple axis up to a multiple of the tile (lane-dense
    # blocks, no divisibility constraint on N itself).
    n_pad = -(-N // tile_n) * tile_n
    pad = n_pad - N

    # Transpose once in the wrapper so xyz is the sublane axis inside the kernel.
    pos_t = jnp.transpose(positions, (0, 2, 1))                   # (B, D, A)
    # Central-atom position for every flattened (atom, triple) slot.
    pos_i = jnp.repeat(pos_t, T, axis=2)                          # (B, D, N)
    # Both neighbor index streams in one array: row 0 = j, row 1 = k.
    idx = jnp.stack([neighbors_j.astype(jnp.int32).reshape(B, N),
                     neighbors_k.astype(jnp.int32).reshape(B, N)], axis=1)

    if pad:
        pos_i = jnp.pad(pos_i, ((0, 0), (0, 0), (0, pad)))
        idx = jnp.pad(idx, ((0, 0), (0, 0), (0, pad)))

    if batch_block is None:
        batch_block = _choose_batch_block(B, A, n_pad, tile_n)
    assert B % batch_block == 0, "batch_block must divide B"

    grid = (B // batch_block, n_pad // tile_n)

    grid_spec = pltpu.PrefetchScalarGridSpec(
        num_scalar_prefetch=0,
        grid=grid,
        in_specs=[
            pl.BlockSpec((batch_block, D, A), lambda b, n: (b, 0, 0)),       # positions^T
            pl.BlockSpec((batch_block, D, tile_n), lambda b, n: (b, 0, n)),  # pos_i repeat
            pl.BlockSpec((batch_block, 2, tile_n), lambda b, n: (b, 0, n)),  # neighbor idx
        ],
        out_specs=pl.BlockSpec((batch_block, 3, tile_n), lambda b, n: (b, 0, n)),
    )

    out = pl.pallas_call(
        _triples_kernel,
        out_shape=jax.ShapeDtypeStruct((B, 3, n_pad), jnp.float32),
        grid_spec=grid_spec,
        compiler_params=pltpu.CompilerParams(
            dimension_semantics=("parallel", "parallel"),
            vmem_limit_bytes=48 * 1024 * 1024,
        ),
    )(pos_t, pos_i, idx)

    out = out[:, :, :N]
    r_ij = out[:, 0, :].reshape(B, A, T)
    r_ik = out[:, 1, :].reshape(B, A, T)
    r_jk = out[:, 2, :].reshape(B, A, T)
    return r_ij, r_ik, r_jk


def _reference(positions, neighbors_j, neighbors_k):
    """Pure-JAX reference reproducing the PyTorch semantics."""
    B = positions.shape[0]
    idx_m = jnp.arange(B)[:, None, None]
    pos_j = positions[idx_m, neighbors_j, :]        # (B, A, T, 3)
    pos_k = positions[idx_m, neighbors_k, :]
    R_ij = pos_j - positions[:, :, None, :]
    R_ik = pos_k - positions[:, :, None, :]
    R_jk = pos_j - pos_k
    r_ij = jnp.linalg.norm(R_ij, ord=2, axis=3) + 1e-9
    r_ik = jnp.linalg.norm(R_ik, ord=2, axis=3) + 1e-9
    r_jk = jnp.linalg.norm(R_jk, ord=2, axis=3) + 1e-9
    return r_ij, r_ik, r_jk


def _check(B, A, T, seed, **kw):
    key = jax.random.PRNGKey(seed)
    k_pos, k_j, k_k = jax.random.split(key, 3)
    positions = jax.random.normal(k_pos, (B, A, 3), dtype=jnp.float32)
    neighbors_j = jax.random.randint(k_j, (B, A, T), 0, A, dtype=jnp.int32)
    neighbors_k = jax.random.randint(k_k, (B, A, T), 0, A, dtype=jnp.int32)

    out = triples_distances(positions, neighbors_j, neighbors_k, **kw)
    jax.block_until_ready(out)
    ref = _reference(positions, neighbors_j, neighbors_k)
    for got, want in zip(out, ref):
        assert jnp.allclose(got, want, rtol=1e-5, atol=1e-5)


if __name__ == "__main__":
    # Small deterministic example: batch=2, atoms=8, triples-per-atom=8 (N=64,
    # padded to one 128-lane tile; grid = (2, 1) so both v7x cores get a step).
    _check(B=2, A=8, T=8, seed=0)
    # Tiled + batch-blocked path: N=256 split into two 128-lane tiles,
    # batch block of 2 -> grid (1, 2).
    _check(B=2, A=8, T=32, seed=0, tile_n=128)
    # Padding path: N=160 -> padded to 256, sliced back after the call.
    _check(B=2, A=8, T=20, seed=1, tile_n=128)
    print("KERNEL_OK")
</pallas_src>

<mosaic_0001>
module attributes {stable_mosaic.version = 11 : i64} {
  func.func @_triples_kernel(%arg0: i32, %arg1: i32, %arg2: memref<1x3x8xf32, #tpu.memory_space<vmem>>, %arg3: memref<1x3x128xf32, #tpu.memory_space<vmem>>, %arg4: memref<1x2x128xi32, #tpu.memory_space<vmem>>, %arg5: memref<1x3x128xf32, #tpu.memory_space<vmem>>) attributes {dimension_semantics = [#tpu.dimension_semantics<parallel>, #tpu.dimension_semantics<parallel>], iteration_bounds = array<i64: 2, 1>, scalar_prefetch = 0 : i64, scratch_operands = 0 : i64, tpu.core_type = #tpu.core_type<tc>, window_params = [{transform_indices = @transform_0, window_bounds = array<i64: 1, 3, 8>}, {transform_indices = @transform_1, window_bounds = array<i64: 1, 3, 128>}, {transform_indices = @transform_2, window_bounds = array<i64: 1, 2, 128>}, {transform_indices = @transform_3, window_bounds = array<i64: 1, 3, 128>}]} {
    %0 = tpu.iota {dimensions = array<i32: 0>} : vector<8x128xi32>
    %c0 = arith.constant 0 : index
    %c0_0 = arith.constant 0 : index
    %c0_1 = arith.constant 0 : index
    %1 = vector.load %arg2[%c0, %c0_0, %c0_1] : memref<1x3x8xf32, #tpu.memory_space<vmem>>, vector<1x3x8xf32>
    %2 = vector.shape_cast %1 : vector<1x3x8xf32> to vector<3x8xf32>
    %c0_2 = arith.constant 0 : index
    %c0_3 = arith.constant 0 : index
    %c0_4 = arith.constant 0 : index
    %3 = vector.load %arg3[%c0_2, %c0_3, %c0_4] : memref<1x3x128xf32, #tpu.memory_space<vmem>>, vector<1x3x128xf32>
    %4 = vector.shape_cast %3 : vector<1x3x128xf32> to vector<3x128xf32>
    %c0_5 = arith.constant 0 : index
    %c0_6 = arith.constant 0 : index
    %c0_7 = arith.constant 0 : index
    %5 = vector.load %arg4[%c0_5, %c0_6, %c0_7] : memref<1x2x128xi32, #tpu.memory_space<vmem>>, vector<1x2x128xi32>
    %6 = vector.shape_cast %5 : vector<1x2x128xi32> to vector<2x128xi32>
    %7 = vector.extract_strided_slice %6 {offsets = [0, 0], sizes = [1, 128], strides = [1, 1]} : vector<2x128xi32> to vector<1x128xi32>
    %8 = vector.broadcast %7 : vector<1x128xi32> to vector<8x128xi32>
    %9 = arith.cmpi eq, %0, %8 : vector<8x128xi32>
    %cst = arith.constant 1.000000e+00 : f32
    %cst_8 = arith.constant 0.000000e+00 : f32
    %10 = vector.broadcast %cst : f32 to vector<8x128xf32>
    %11 = vector.broadcast %cst_8 : f32 to vector<8x128xf32>
    %12 = arith.select %9, %10, %11 : vector<8x128xi1>, vector<8x128xf32>
    %13 = vector.extract_strided_slice %6 {offsets = [1, 0], sizes = [1, 128], strides = [1, 1]} : vector<2x128xi32> to vector<1x128xi32>
    %14 = vector.broadcast %13 : vector<1x128xi32> to vector<8x128xi32>
    %15 = arith.cmpi eq, %0, %14 : vector<8x128xi32>
    %cst_9 = arith.constant 1.000000e+00 : f32
    %cst_10 = arith.constant 0.000000e+00 : f32
    %16 = vector.broadcast %cst_9 : f32 to vector<8x128xf32>
    %17 = vector.broadcast %cst_10 : f32 to vector<8x128xf32>
    %18 = arith.select %15, %16, %17 : vector<8x128xi1>, vector<8x128xf32>
    %cst_11 = arith.constant dense<0.000000e+00> : vector<3x128xf32>
    %19 = tpu.matmul %2, %12, %cst_11 {dimension_numbers = #tpu.dot_dimension_numbers<[1], [0], [0], [1], [0, 0, 1, 1], [], []>} : vector<3x8xf32>, vector<8x128xf32>, vector<3x128xf32> -> vector<3x128xf32>
    %cst_12 = arith.constant dense<0.000000e+00> : vector<3x128xf32>
    %20 = tpu.matmul %2, %18, %cst_12 {dimension_numbers = #tpu.dot_dimension_numbers<[1], [0], [0], [1], [0, 0, 1, 1], [], []>} : vector<3x8xf32>, vector<8x128xf32>, vector<3x128xf32> -> vector<3x128xf32>
    %21 = arith.subf %19, %4 : vector<3x128xf32>
    %22 = arith.mulf %21, %21 : vector<3x128xf32>
    %cst_13 = arith.constant dense<0.000000e+00> : vector<128xf32>
    %23 = vector.multi_reduction <add>, %22, %cst_13 [0] : vector<3x128xf32> to vector<128xf32>
    %24 = vector.shape_cast %23 : vector<128xf32> to vector<1x128xf32>
    %25 = math.sqrt %24 : vector<1x128xf32>
    %cst_14 = arith.constant 9.99999971E-10 : f32
    %26 = vector.broadcast %cst_14 : f32 to vector<1x128xf32>
    %27 = arith.addf %25, %26 : vector<1x128xf32>
    %28 = arith.subf %20, %4 : vector<3x128xf32>
    %29 = arith.mulf %28, %28 : vector<3x128xf32>
    %cst_15 = arith.constant dense<0.000000e+00> : vector<128xf32>
    %30 = vector.multi_reduction <add>, %29, %cst_15 [0] : vector<3x128xf32> to vector<128xf32>
    %31 = vector.shape_cast %30 : vector<128xf32> to vector<1x128xf32>
    %32 = math.sqrt %31 : vector<1x128xf32>
    %cst_16 = arith.constant 9.99999971E-10 : f32
    %33 = vector.broadcast %cst_16 : f32 to vector<1x128xf32>
    %34 = arith.addf %32, %33 : vector<1x128xf32>
    %35 = arith.subf %19, %20 : vector<3x128xf32>
    %36 = arith.mulf %35, %35 : vector<3x128xf32>
    %cst_17 = arith.constant dense<0.000000e+00> : vector<128xf32>
    %37 = vector.multi_reduction <add>, %36, %cst_17 [0] : vector<3x128xf32> to vector<128xf32>
    %38 = vector.shape_cast %37 : vector<128xf32> to vector<1x128xf32>
    %39 = math.sqrt %38 : vector<1x128xf32>
    %cst_18 = arith.constant 9.99999971E-10 : f32
    %40 = vector.broadcast %cst_18 : f32 to vector<1x128xf32>
    %41 = arith.addf %39, %40 : vector<1x128xf32>
    %42 = tpu.concatenate %27, %34, %41 in 0 : vector<1x128xf32>, vector<1x128xf32>, vector<1x128xf32> -> vector<3x128xf32>
    %c0_19 = arith.constant 0 : index
    %c0_20 = arith.constant 0 : index
    %c0_21 = arith.constant 0 : index
    %43 = vector.load %arg5[%c0_19, %c0_20, %c0_21] : memref<1x3x128xf32, #tpu.memory_space<vmem>>, vector<1x3x128xf32>
    %44 = vector.shape_cast %43 : vector<1x3x128xf32> to vector<3x128xf32>
    %45 = vector.shape_cast %42 : vector<3x128xf32> to vector<1x3x128xf32>
    tpu.vector_store %arg5[%c0_19, %c0_20, %c0_21], %45 {strides = array<i32>} : memref<1x3x128xf32, #tpu.memory_space<vmem>>, vector<1x3x128xf32>,
    return
  }
  func.func @transform_0(%arg0: i32, %arg1: i32) -> (i32, i32, i32) {
    %c0_i32 = arith.constant 0 : i32
    %c0_i32_0 = arith.constant 0 : i32
    %c0_i32_1 = arith.constant 0 : i32
    return %arg0, %c0_i32, %c0_i32_0 : i32, i32, i32
  }
  func.func @transform_1(%arg0: i32, %arg1: i32) -> (i32, i32, i32) {
    %c0_i32 = arith.constant 0 : i32
    %c0_i32_0 = arith.constant 0 : i32
    return %arg0, %c0_i32, %arg1 : i32, i32, i32
  }
  func.func @transform_2(%arg0: i32, %arg1: i32) -> (i32, i32, i32) {
    %c0_i32 = arith.constant 0 : i32
    %c0_i32_0 = arith.constant 0 : i32
    return %arg0, %c0_i32, %arg1 : i32, i32, i32
  }
  func.func @transform_3(%arg0: i32, %arg1: i32) -> (i32, i32, i32) {
    %c0_i32 = arith.constant 0 : i32
    %c0_i32_0 = arith.constant 0 : i32
    return %arg0, %c0_i32, %arg1 : i32, i32, i32
  }
}

</mosaic_0001>

<llo_original>
// kernel: tpu_custom_call.1
$region0: #{tpu_custom_call.1}
  #allocation0 [shape = 'u32[]', space=smem, size = 0x4, offset = 0x4, fixed_abs, tag = 'smem constant byte address 0x4 - core index']
  #allocation1 [shape = 'u32[144,128]{1,0:T(1,128)}', space=vmem, size = 0x12000, scoped, tag = 'internal scratch']
  %s0 = inlined_call_operand.vmem [shape: f32[2,3,8], index: 0, kind: input, shape index: {}]
  %s1 = inlined_call_operand.vmem [shape: f32[2,3,128], index: 1, kind: input, shape index: {}]
  %s2 = inlined_call_operand.vmem [shape: s32[2,2,128], index: 2, kind: input, shape index: {}]
  %s3 = inlined_call_operand.vmem [shape: f32[2,3,128], index: 3, kind: output, shape index: {}]
  %s4 = sld [smem:[#allocation0]]
  $region45: #{tpu_custom_call.1} parent=0
    _
  %s6 = ssub.s32 1, %s4
  %s7 = scalar_select 0, %s6, %s4
  loop: start=0, step=1, limit=4
  $region2: #{tpu_custom_call.1} parent=0 // loop_pre_header
    _
  $region3: #{tpu_custom_call.1} parent=0 // loop_header
    %s9 = sphi 0, %s13
    %p10 = scmp.ge.s32.totalorder %s9, 4
    %s16 = sphi 0, %s28
    %s17 = sphi 0, %s24
    %s18 = sphi 0, %s16
    %s19 = sphi 0, %s17
    %s20 = sphi 0, %s18
    %s21 = sphi 0, %s19
    %s31 = sphi 0, %s33
    %s34 = sphi 0, %s31
    %s35 = sphi 0, %s34
    %s51 = sphi 0, %s35
    %s59 = sphi 0, %s61
    %s62 = sphi 0, %s59
    %s63 = sphi 0, %s62
    %s79 = sphi 0, %s63
    %s87 = sphi 0, %s89
    %s90 = sphi 0, %s87
    %s91 = sphi 0, %s90
    %s107 = sphi 0, %s91
    %s115 = sphi 0, %s117
    %s118 = sphi 0, %s115
    %s119 = sphi 0, %s118
    %s135 = sphi 0, %s119
  $region4: #{tpu_custom_call.1} parent=0 // loop_header_branch
    %12 = sbr.rel (%p10) target = $region8
  $region5: #{tpu_custom_call.1} parent=0 // loop_body
    %s14 = ssub.s32 %s9, 1
    %s15 = ssub.s32 %s9, 2
    %s22 = sadd.s32 1, %s17
    %p23 = scmp.ge.s32.totalorder %s22, 1
    %s24 = scalar_select %p23, 0, %s22
    %s25 = sadd.s32 1, %s16
    %s26 = scalar_select %p23, %s25, %s16
    %p27 = scmp.ge.s32.totalorder %s26, 2
    %s28 = scalar_select %p27, 0, %s26
    %s29 = ssub.s32 %s16, %s28
    %p30 = scmp.eq.s32.totalorder %s29, 0
    %s32 = sadd.s32 %s31, 1
    %s33 = scalar_select %p30, %s31, %s32
    %p36 = pneg %p30
    %p37 = scmp.eq.s32.totalorder %s9, 1
    %p38 = por %p36, %p37
    %p39 = scmp.ne.s32.totalorder %s31, %s34
    %p40 = scmp.eq.s32.totalorder %s9, 0
    %p41 = por %p39, %p40
    %p42 = scmp.ne.s32.totalorder %s31, %s34
    %p43 = scmp.eq.s32.totalorder %s14, 1
    %p44 = por %p42, %p43
    %p45 = scmp.ne.s32.totalorder %s34, %s35
    %p46 = scmp.eq.s32.totalorder %s14, 0
    %p47 = por %p45, %p46
    %p48 = scmp.ne.s32.totalorder %s34, %s35
    %p49 = scmp.eq.s32.totalorder %s15, 1
    %p50 = por %p48, %p49
    %p52 = scmp.ne.s32.totalorder %s35, %s51
    %p53 = scmp.eq.s32.totalorder %s15, 0
    %p54 = por %p52, %p53
    %s55 = ssub.s32 %s16, %s28
    %s56 = ssub.s32 %s17, %s24
    %s57 = sor.u32 %s55, %s56
    %p58 = scmp.eq.s32.totalorder %s57, 0
    %s60 = sadd.s32 %s59, 1
    %s61 = scalar_select %p58, %s59, %s60
    %p64 = pneg %p58
    %p65 = scmp.eq.s32.totalorder %s9, 1
    %p66 = por %p64, %p65
    %p67 = scmp.ne.s32.totalorder %s59, %s62
    %p68 = scmp.eq.s32.totalorder %s9, 0
    %p69 = por %p67, %p68
    %p70 = scmp.ne.s32.totalorder %s59, %s62
    %p71 = scmp.eq.s32.totalorder %s14, 1
    %p72 = por %p70, %p71
    %p73 = scmp.ne.s32.totalorder %s62, %s63
    %p74 = scmp.eq.s32.totalorder %s14, 0
    %p75 = por %p73, %p74
    %p76 = scmp.ne.s32.totalorder %s62, %s63
    %p77 = scmp.eq.s32.totalorder %s15, 1
    %p78 = por %p76, %p77
    %p80 = scmp.ne.s32.totalorder %s63, %s79
    %p81 = scmp.eq.s32.totalorder %s15, 0
    %p82 = por %p80, %p81
    %s83 = ssub.s32 %s16, %s28
    %s84 = ssub.s32 %s17, %s24
    %s85 = sor.u32 %s83, %s84
    %p86 = scmp.eq.s32.totalorder %s85, 0
    %s88 = sadd.s32 %s87, 1
    %s89 = scalar_select %p86, %s87, %s88
    %p92 = pneg %p86
    %p93 = scmp.eq.s32.totalorder %s9, 1
    %p94 = por %p92, %p93
    %p95 = scmp.ne.s32.totalorder %s87, %s90
    %p96 = scmp.eq.s32.totalorder %s9, 0
    %p97 = por %p95, %p96
    %p98 = scmp.ne.s32.totalorder %s87, %s90
    %p99 = scmp.eq.s32.totalorder %s14, 1
    %p100 = por %p98, %p99
    %p101 = scmp.ne.s32.totalorder %s90, %s91
    %p102 = scmp.eq.s32.totalorder %s14, 0
    %p103 = por %p101, %p102
    %p104 = scmp.ne.s32.totalorder %s90, %s91
    %p105 = scmp.eq.s32.totalorder %s15, 1
    %p106 = por %p104, %p105
    %p108 = scmp.ne.s32.totalorder %s91, %s107
    %p109 = scmp.eq.s32.totalorder %s15, 0
    %p110 = por %p108, %p109
    %s111 = ssub.s32 %s16, %s28
    %s112 = ssub.s32 %s17, %s24
    %s113 = sor.u32 %s111, %s112
    %p114 = scmp.eq.s32.totalorder %s113, 0
    %s116 = sadd.s32 %s115, 1
    %s117 = scalar_select %p114, %s115, %s116
    %p120 = pneg %p114
    %p121 = scmp.eq.s32.totalorder %s9, 1
    %p122 = por %p120, %p121
    %p123 = scmp.ne.s32.totalorder %s115, %s118
    %p124 = scmp.eq.s32.totalorder %s9, 0
    %p125 = por %p123, %p124
    %p126 = scmp.ne.s32.totalorder %s115, %s118
    %p127 = scmp.eq.s32.totalorder %s14, 1
    %p128 = por %p126, %p127
    %p129 = scmp.ne.s32.totalorder %s118, %s119
    %p130 = scmp.eq.s32.totalorder %s14, 0
    %p131 = por %p129, %p130
    %p132 = scmp.ne.s32.totalorder %s118, %s119
    %p133 = scmp.eq.s32.totalorder %s15, 1
    %p134 = por %p132, %p133
    %p136 = scmp.ne.s32.totalorder %s119, %s135
    %p137 = scmp.eq.s32.totalorder %s15, 0
    %p138 = por %p136, %p137
    %p139 = scmp.le.s32.totalorder 1, %s9
    %p140 = scmp.lt.s32.totalorder %s9, 3
    %p141 = pnand %p139, %p140
    %p142 = pneg %p141
    // Predicated region
    $region9: #{tpu_custom_call.1} parent=5 // pred_check
      _
    $region10: #{tpu_custom_call.1} parent=5 // pred_check_branch
      %144 = sbr.rel (%p141) target = $region12
    $region11: #{tpu_custom_call.1} parent=5 // pred_region
      %s145 = ssub.s32 %s9, 1
    $region12: #{tpu_custom_call.1} parent=5 // pred_fallthru
      _
    %p146 = scmp.lt.s32.totalorder %s9, 2
    // Predicated region
    $region13: #{tpu_custom_call.1} parent=5 // pred_check
      %p147 = pneg %p146
    $region14: #{tpu_custom_call.1} parent=5 // pred_check_branch
      %149 = sbr.rel (%p147) target = $region16
    $region15: #{tpu_custom_call.1} parent=5 // pred_region
      // Predicated region
      $region17: #{tpu_custom_call.1} parent=15 // pred_check
        %p150 = pneg %p41
      $region18: #{tpu_custom_call.1} parent=15 // pred_check_branch
        %152 = sbr.rel (%p150) target = $region20
      $region19: #{tpu_custom_call.1} parent=15 // pred_region
        %p153 = scmp.lt.s32.totalorder %s16, 1
        %s154 = scalar_select %p153, %s16, 1
        %s155 = smul.addr %s154, 4
        %s156 = scalar_lea.vmem %s0, %s155
      $region20: #{tpu_custom_call.1} parent=15 // pred_fallthru
        _
      // Predicated region
      $region21: #{tpu_custom_call.1} parent=15 // pred_check
        %p157 = pneg %p69
      $region22: #{tpu_custom_call.1} parent=15 // pred_check_branch
        %159 = sbr.rel (%p157) target = $region24
      $region23: #{tpu_custom_call.1} parent=15 // pred_region
        %p160 = scmp.lt.s32.totalorder %s16, 1
        %s161 = scalar_select %p160, %s16, 1
        %p162 = scmp.lt.s32.totalorder %s17, 0
        %s163 = scalar_select %p162, %s17, 0
        %s164 = sadd.s32 %s163, %s161
        %s165 = smul.addr %s164, 4
        %s166 = scalar_lea.vmem %s1, %s165
      $region24: #{tpu_custom_call.1} parent=15 // pred_fallthru
        _
      // Predicated region
      $region25: #{tpu_custom_call.1} parent=15 // pred_check
        %p167 = pneg %p97
      $region26: #{tpu_custom_call.1} parent=15 // pred_check_branch
        %169 = sbr.rel (%p167) target = $region28
      $region27: #{tpu_custom_call.1} parent=15 // pred_region
        %p170 = scmp.lt.s32.totalorder %s16, 1
        %s171 = scalar_select %p170, %s16, 1
        %p172 = scmp.lt.s32.totalorder %s17, 0
        %s173 = scalar_select %p172, %s17, 0
        %s174 = sadd.s32 %s173, %s171
        %s175 = smul.addr %s174, 2
        %s176 = scalar_lea.vmem %s2, %s175
      $region28: #{tpu_custom_call.1} parent=15 // pred_fallthru
        _
    $region16: #{tpu_custom_call.1} parent=5 // pred_fallthru
      _
    %p177 = scmp.le.s32.totalorder 1, %s9
    %p178 = scmp.lt.s32.totalorder %s9, 3
    %p179 = pnand %p177, %p178
    %p180 = pneg %p179
    // Predicated region
    $region29: #{tpu_custom_call.1} parent=5 // pred_check
      _
    $region30: #{tpu_custom_call.1} parent=5 // pred_check_branch
      %182 = sbr.rel (%p179) target = $region32
    $region31: #{tpu_custom_call.1} parent=5 // pred_region
      %s183 = ssub.s32 %s9, 1
      %p184 = scmp.lt.s32.totalorder %s18, 1
      %s185 = scalar_select %p184, %s18, 1
      %s186 = smul.addr %s185, 4
      %s187 = scalar_lea.vmem %s0, %s186
      %p188 = pneg %p47
      %p189 = pneg %p44
      %p190 = scmp.lt.s32.totalorder %s18, 1
      %s191 = scalar_select %p190, %s18, 1
      %p192 = scmp.lt.s32.totalorder %s19, 0
      %s193 = scalar_select %p192, %s19, 0
      %s194 = sadd.s32 %s193, %s191
      %s195 = smul.addr %s194, 4
      %s196 = scalar_lea.vmem %s1, %s195
      %p197 = pneg %p75
      %p198 = pneg %p72
      %p199 = scmp.lt.s32.totalorder %s18, 1
      %s200 = scalar_select %p199, %s18, 1
      %p201 = scmp.lt.s32.totalorder %s19, 0
      %s202 = scalar_select %p201, %s19, 0
      %s203 = sadd.s32 %s202, %s200
      %s204 = smul.addr %s203, 2
      %s205 = scalar_lea.vmem %s2, %s204
      %p206 = pneg %p103
      %p207 = pneg %p100
      %p208 = pneg %p131
      %p209 = pneg %p128
      %p210 = scmp.lt.s32.totalorder %s18, 1
      %s211 = scalar_select %p210, %s18, 1
      %p212 = scmp.lt.s32.totalorder %s19, 0
      %s213 = scalar_select %p212, %s19, 0
      %s214 = sadd.s32 %s213, %s211
      %s215 = smul.addr %s214, 4
      %s216 = scalar_lea.vmem %s3, %s215
      %p217 = scmp.lt.s32.totalorder %s18, 1
      %s218 = scalar_select %p217, %s18, 1
      %s219 = smul.addr %s218, 4
      %s220 = scalar_lea.vmem %s0, %s219
      %p221 = scmp.lt.s32.totalorder %s18, 1
      %s222 = scalar_select %p221, %s18, 1
      %p223 = scmp.lt.s32.totalorder %s19, 0
      %s224 = scalar_select %p223, %s19, 0
      %s225 = sadd.s32 %s224, %s222
      %s226 = smul.addr %s225, 4
      %s227 = scalar_lea.vmem %s1, %s226
      %p228 = scmp.lt.s32.totalorder %s18, 1
      %s229 = scalar_select %p228, %s18, 1
      %p230 = scmp.lt.s32.totalorder %s19, 0
      %s231 = scalar_select %p230, %s19, 0
      %s232 = sadd.s32 %s231, %s229
      %s233 = smul.addr %s232, 2
      %s234 = scalar_lea.vmem %s2, %s233
      %p235 = scmp.lt.s32.totalorder %s18, 1
      %s236 = scalar_select %p235, %s18, 1
      %p237 = scmp.lt.s32.totalorder %s19, 0
      %s238 = scalar_select %p237, %s19, 0
      %s239 = sadd.s32 %s238, %s236
      %s240 = smul.addr %s239, 4
      %s241 = scalar_lea.vmem %s3, %s240
      %v242 = vlaneseq
      %v243 = vshrl.u32 %v242, 7
      %v244 = vld [vmem:[%s220] sm:$0x7]
      %v245 = vld [vmem:[%s227] sm:$0x7]
      %v246 = vld [vmem:[%s234] sm:$0x3]
      %v247 = vlaneseq
      %v248 = vshrl.u32 %v247, 7
      %v249 = vsub.s32 0, %v248
      %v250 = vrot.slane %v246, %v249
      %vm251 = vcmp.eq.s32.totalorder %v243, %v250
      %v252 = vsel %vm251, 1.0, 0.0
      %v253 = vlaneseq
      %v254 = vshrl.u32 %v253, 7
      %v255 = vsub.s32 1, %v254
      %v256 = vrot.slane %v246, %v255
      %vm257 = vcmp.eq.s32.totalorder %v243, %v256
      %v258 = vsel %vm257, 1.0, 0.0
      %vm259 = vcmask 64512
      %v261 = vsel %vm259, %v244, 0
      %263 = vmatprep.subr.mxu0 0.0
      %264 = vmatpush1.msra.mxu0 %v252
      %265 = vmatprep.subr.mxu0 0.0
      %266 = vmatpush1.msra.mxu0 0.0
      %267 = vmatprep.subr.mxu0 0.0
      %268 = vmatpush1.msra.mxu0 0.0
      %269 = vmatprep.subr.mxu0 0.0
      %270 = vmatpush1.msra.mxu0 0.0
      %271 = vmatprep.subr.mxu0 0.0
      %272 = vmatpush1.msra.mxu0 0.0
      %273 = vmatprep.subr.mxu0 0.0
      %274 = vmatpush1.msra.mxu0 0.0
      %275 = vmatprep.subr.mxu0 0.0
      %276 = vmatpush1.msra.mxu0 0.0
      %277 = vmatprep.subr.mxu0 0.0
      %278 = vmatpush1.msra.mxu0 0.0
      %279 = vmatprep.subr.mxu0 0.0
      %280 = vmatpush1.msra.mxu0 0.0
      %281 = vmatprep.subr.mxu0 0.0
      %282 = vmatpush1.msra.mxu0 0.0
      %283 = vmatprep.subr.mxu0 0.0
      %284 = vmatpush1.msra.mxu0 0.0
      %285 = vmatprep.subr.mxu0 0.0
      %286 = vmatpush1.msra.mxu0 0.0
      %287 = vmatprep.subr.mxu0 0.0
      %288 = vmatpush1.msra.mxu0 0.0
      %289 = vmatprep.subr.mxu0 0.0
      %290 = vmatpush1.msra.mxu0 0.0
      %291 = vmatprep.subr.mxu0 0.0
      %292 = vmatpush1.msra.mxu0 0.0
      %293 = vmatprep.subr.mxu0 0.0
      %294 = vmatpush1.msra.mxu0 0.0
      %295 = vmatprep.subr.mxu0 0.0
      %296 = vmatpush1.msra.mxu0 0.0
      %297 = vmatprep.subr.mxu0 0.0
      %298 = vmatpush1.msra.mxu0 0.0
      %299 = vmatprep.subr.mxu0 0.0
      %300 = vmatpush1.msra.mxu0 0.0
      %301 = vmatprep.subr.mxu0 0.0
      %302 = vmatpush1.msra.mxu0 0.0
      %303 = vmatprep.subr.mxu0 0.0
      %304 = vmatpush1.msra.mxu0 0.0
      %305 = vmatprep.subr.mxu0 0.0
      %306 = vmatpush1.msra.mxu0 0.0
      %307 = vmatprep.subr.mxu0 0.0
      %308 = vmatpush1.msra.mxu0 0.0
      %309 = vmatprep.subr.mxu0 0.0
      %310 = vmatpush1.msra.mxu0 0.0
      %311 = vmatprep.subr.mxu0 0.0
      %312 = vmatpush1.msra.mxu0 0.0
      %313 = vmatprep.subr.mxu0 0.0
      %314 = vmatpush1.msra.mxu0 0.0
      %315 = vmatprep.subr.mxu0 0.0
      %316 = vmatpush1.msra.mxu0 0.0
      %317 = vmatprep.subr.mxu0 0.0
      %318 = vmatpush1.msra.mxu0 0.0
      %319 = vmatprep.subr.mxu0 0.0
      %320 = vmatpush1.msra.mxu0 0.0
      %321 = vmatprep.subr.mxu0 0.0
      %322 = vmatpush1.msra.mxu0 0.0
      %323 = vmatprep.subr.mxu0 0.0
      %324 = vmatpush1.msra.mxu0 0.0
      %325 = vmatprep.subr.mxu0 0.0
      %326 = vmatpush1.msra.mxu0 0.0
      %327 = vmatprep.mubr.f32.mxu0 0.0
      %328 = vmatmul.mubr.f32.gmra.mrb[0].mxu0 %v261
      %v329 = vpop.f32.mrb[0].mxu0
      %v330 = vadd.f32 0.0, %v329
      %v331 = vpop.f32.mrb[0].mxu0
      %332 = vdwg.mxu0
      %333 = vmatprep.subr.mxu0 0.0
      %334 = vmatpush1.msra.mxu0 %v258
      %335 = vmatprep.subr.mxu0 0.0
      %336 = vmatpush1.msra.mxu0 0.0
      %337 = vmatprep.subr.mxu0 0.0
      %338 = vmatpush1.msra.mxu0 0.0
      %339 = vmatprep.subr.mxu0 0.0
      %340 = vmatpush1.msra.mxu0 0.0
      %341 = vmatprep.subr.mxu0 0.0
      %342 = vmatpush1.msra.mxu0 0.0
      %343 = vmatprep.subr.mxu0 0.0
      %344 = vmatpush1.msra.mxu0 0.0
      %345 = vmatprep.subr.mxu0 0.0
      %346 = vmatpush1.msra.mxu0 0.0
      %347 = vmatprep.subr.mxu0 0.0
      %348 = vmatpush1.msra.mxu0 0.0
      %349 = vmatprep.subr.mxu0 0.0
      %350 = vmatpush1.msra.mxu0 0.0
      %351 = vmatprep.subr.mxu0 0.0
      %352 = vmatpush1.msra.mxu0 0.0
      %353 = vmatprep.subr.mxu0 0.0
      %354 = vmatpush1.msra.mxu0 0.0
      %355 = vmatprep.subr.mxu0 0.0
      %356 = vmatpush1.msra.mxu0 0.0
      %357 = vmatprep.subr.mxu0 0.0
      %358 = vmatpush1.msra.mxu0 0.0
      %359 = vmatprep.subr.mxu0 0.0
      %360 = vmatpush1.msra.mxu0 0.0
      %361 = vmatprep.subr.mxu0 0.0
      %362 = vmatpush1.msra.mxu0 0.0
      %363 = vmatprep.subr.mxu0 0.0
      %364 = vmatpush1.msra.mxu0 0.0
      %365 = vmatprep.subr.mxu0 0.0
      %366 = vmatpush1.msra.mxu0 0.0
      %367 = vmatprep.subr.mxu0 0.0
      %368 = vmatpush1.msra.mxu0 0.0
      %369 = vmatprep.subr.mxu0 0.0
      %370 = vmatpush1.msra.mxu0 0.0
      %371 = vmatprep.subr.mxu0 0.0
      %372 = vmatpush1.msra.mxu0 0.0
      %373 = vmatprep.subr.mxu0 0.0
      %374 = vmatpush1.msra.mxu0 0.0
      %375 = vmatprep.subr.mxu0 0.0
      %376 = vmatpush1.msra.mxu0 0.0
      %377 = vmatprep.subr.mxu0 0.0
      %378 = vmatpush1.msra.mxu0 0.0
      %379 = vmatprep.subr.mxu0 0.0
      %380 = vmatpush1.msra.mxu0 0.0
      %381 = vmatprep.subr.mxu0 0.0
      %382 = vmatpush1.msra.mxu0 0.0
      %383 = vmatprep.subr.mxu0 0.0
      %384 = vmatpush1.msra.mxu0 0.0
      %385 = vmatprep.subr.mxu0 0.0
      %386 = vmatpush1.msra.mxu0 0.0
      %387 = vmatprep.subr.mxu0 0.0
      %388 = vmatpush1.msra.mxu0 0.0
      %389 = vmatprep.subr.mxu0 0.0
      %390 = vmatpush1.msra.mxu0 0.0
      %391 = vmatprep.subr.mxu0 0.0
      %392 = vmatpush1.msra.mxu0 0.0
      %393 = vmatprep.subr.mxu0 0.0
      %394 = vmatpush1.msra.mxu0 0.0
      %395 = vmatprep.subr.mxu0 0.0
      %396 = vmatpush1.msra.mxu0 0.0
      %397 = vmatprep.mubr.f32.mxu0 0.0
      %398 = vmatmul.mubr.f32.gmra.mrb[0].mxu0 %v261
      %v399 = vpop.f32.mrb[0].mxu0
      %v400 = vadd.f32 0.0, %v399
      %v401 = vpop.f32.mrb[0].mxu0
      %402 = vdwg.mxu0
      %v403 = vsub.f32 %v330, %v245
      %v404 = vmul.f32 %v403, %v403
      %vm405 = vcmask 1042432
      %v406 = vsel %vm405, %v404, 0.0
      %v407 = vrot.slane %v406, 4
      %v408 = vadd.f32 %v406, %v407
      %v409 = vrot.slane %v408, 2
      %v410 = vadd.f32 %v408, %v409
      %v411 = vrot.slane %v410, 1
      %v412 = vadd.f32 %v410, %v411
      %v413 = vrsqrt.pop %v412
      %v414 = vmul.f32 %v412, %v413
      %vm415 = vcmp.eq.f32.partialorder %v412, inf
      %v416 = vsel %vm415, %v412, %v414
      %vm417 = vcmp.eq.f32.partialorder %v412, 0.0
      %v418 = vand.u32 %v412, 2147483648
      %v419 = vsel %vm417, %v418, %v416
      %v420 = vadd.f32 %v419, 1e-09
      %v421 = vsub.f32 %v400, %v245
      %v422 = vmul.f32 %v421, %v421
      %v423 = vsel %vm405, %v422, 0.0
      %v424 = vrot.slane %v423, 4
      %v425 = vadd.f32 %v423, %v424
      %v426 = vrot.slane %v425, 2
      %v427 = vadd.f32 %v425, %v426
      %v428 = vrot.slane %v427, 1
      %v429 = vadd.f32 %v427, %v428
      %v430 = vrsqrt.pop %v429
      %v431 = vmul.f32 %v429, %v430
      %vm432 = vcmp.eq.f32.partialorder %v429, inf
      %v433 = vsel %vm432, %v429, %v431
      %vm434 = vcmp.eq.f32.partialorder %v429, 0.0
      %v435 = vand.u32 %v429, 2147483648
      %v436 = vsel %vm434, %v435, %v433
      %v437 = vadd.f32 %v436, 1e-09
      %v438 = vsub.f32 %v330, %v400
      %v439 = vmul.f32 %v438, %v438
      %v440 = vsel %vm405, %v439, 0.0
      %v441 = vrot.slane %v440, 4
      %v442 = vadd.f32 %v440, %v441
      %v443 = vrot.slane %v442, 2
      %v444 = vadd.f32 %v442, %v443
      %v445 = vrot.slane %v444, 1
      %v446 = vadd.f32 %v444, %v445
      %v447 = vrsqrt.pop %v446
      %v448 = vmul.f32 %v446, %v447
      %vm449 = vcmp.eq.f32.partialorder %v446, inf
      %v450 = vsel %vm449, %v446, %v448
      %vm451 = vcmp.eq.f32.partialorder %v446, 0.0
      %v452 = vand.u32 %v446, 2147483648
      %v453 = vsel %vm451, %v452, %v450
      %v454 = vadd.f32 %v453, 1e-09
      %vm455 = vcmask 1040384
      %v456 = vsel %vm455, %v420, %v437
      %vm457 = vcmask 1041408
      %v458 = vsel %vm457, %v456, %v454
      %459 = vst [vmem:[%s241] sm:$0x7] %v458
      %p460 = scmp.lt.s32.totalorder %s18, 1
      %s461 = scalar_select %p460, %s18, 1
      %p462 = scmp.lt.s32.totalorder %s19, 0
      %s463 = scalar_select %p462, %s19, 0
      %s464 = sadd.s32 %s463, %s461
      %s465 = smul.addr %s464, 4
      %s466 = scalar_lea.vmem %s3, %s465
      // Predicated region
      $region33: #{tpu_custom_call.1} parent=31 // pred_check
        %p467 = pneg %p128
      $region34: #{tpu_custom_call.1} parent=31 // pred_check_branch
        %469 = sbr.rel (%p467) target = $region36
      $region35: #{tpu_custom_call.1} parent=31 // pred_region
        _
      $region36: #{tpu_custom_call.1} parent=31 // pred_fallthru
        _
    $region32: #{tpu_custom_call.1} parent=5 // pred_fallthru
      _
    %p470 = scmp.le.s32.totalorder 2, %s9
    // Predicated region
    $region37: #{tpu_custom_call.1} parent=5 // pred_check
      %p471 = pneg %p470
    $region38: #{tpu_custom_call.1} parent=5 // pred_check_branch
      %473 = sbr.rel (%p471) target = $region40
    $region39: #{tpu_custom_call.1} parent=5 // pred_region
      %s474 = ssub.s32 %s9, 2
      // Predicated region
      $region41: #{tpu_custom_call.1} parent=39 // pred_check
        %p475 = pneg %p134
      $region42: #{tpu_custom_call.1} parent=39 // pred_check_branch
        %477 = sbr.rel (%p475) target = $region44
      $region43: #{tpu_custom_call.1} parent=39 // pred_region
        %p478 = scmp.lt.s32.totalorder %s20, 1
        %s479 = scalar_select %p478, %s20, 1
        %p480 = scmp.lt.s32.totalorder %s21, 0
        %s481 = scalar_select %p480, %s21, 0
        %s482 = sadd.s32 %s481, %s479
        %s483 = smul.addr %s482, 4
        %s484 = scalar_lea.vmem %s3, %s483
      $region44: #{tpu_custom_call.1} parent=39 // pred_fallthru
        _
    $region40: #{tpu_custom_call.1} parent=5 // pred_fallthru
      _
  $region6: #{tpu_custom_call.1} parent=0 // loop_footer
    %s13 = sadd.s32 1, %s9
  $region7: #{tpu_custom_call.1} parent=0 // loop_footer_branch
    %8 = sbr.rel target = $region3
  $region8: #{tpu_custom_call.1} parent=0 // loop_exit
    _

</llo_original>
